<compile_context>
chip_gen: v7x
topology: tpu7x:2x2x1
jax: 0.10.0
libtpu: 0.0.40
codegen_flags: <defaults>
</compile_context>

<pallas_src>
import functools
import math

import jax
import jax.numpy as jnp
from jax.experimental import pallas as pl
from jax.experimental.pallas import tpu as pltpu


# -----------------------------------------------------------------------------
# Module-equivalent dimension schedule (Autoencoder.__init__).
# -----------------------------------------------------------------------------
def build_layer_dimensions(original_dim, latent_dim, reduction_factor=0.3):
    dimension_difference = original_dim - latent_dim
    reduction_term = int(reduction_factor * dimension_difference)
    layer_dimensions = [original_dim]
    while True:
        if layer_dimensions[-1] - reduction_term > latent_dim:
            layer_dimensions.append(layer_dimensions[-1] - reduction_term)
        else:
            layer_dimensions.append(latent_dim)
            break
    return layer_dimensions


def _round_up(n, m):
    return ((n + m - 1) // m) * m


def _cdiv(a, b):
    return -(-a // b)


def _gelu_exact(x):
    # GELU(x) = 0.5 * x * (1 + erf(x / sqrt(2)))  -- matches torch.nn.GELU()
    inv_sqrt2 = jnp.float32(0.7071067811865476)
    return 0.5 * x * (1.0 + jax.lax.erf(x * inv_sqrt2))


def _gelu_tanh(x):
    # tanh approximation -- routes through the EUP instead of a long VPU polynomial.
    c0 = jnp.float32(0.7978845608028654)   # sqrt(2/pi)
    c1 = jnp.float32(0.044715)
    return 0.5 * x * (1.0 + jnp.tanh(c0 * (x + c1 * x * x * x)))


# -----------------------------------------------------------------------------
# Kernel: fused encoder+decoder MLP on one batch tile.
# -----------------------------------------------------------------------------
def autoencoder_kernel(x_ref, w_ref, b_ref, o_ref, *, d_in, d_out, approximate_gelu):
    """
    x_ref : [TB, d_in]        activation tile (real feature width, no wrapper pad)
    w_ref : [L, P, P]         all layer weights, zero-padded, VMEM-resident
    b_ref : [L, 1, P]         all layer biases (f32), zero-padded, VMEM-resident
    o_ref : [TB, d_out]       output tile (real feature width)
    Padded lanes stay exactly zero through every layer: padded weight rows/cols
    and biases are zero and GELU(0) == 0.
    """
    n_layers, pad_width, _ = w_ref.shape       # static
    mm_dtype = w_ref.dtype                     # MXU operand dtype (bf16 default)
    gelu = _gelu_tanh if approximate_gelu else _gelu_exact

    h = x_ref[...].astype(mm_dtype)            # [TB, d_in]
    act = None
    for i in range(n_layers):                  # fully unrolled MXU matmul chain
        if i == 0 and d_in != pad_width:
            # Contract only over the real input rows of W[0]; rows >= d_in are zero.
            w = w_ref[0, :d_in, :]             # [d_in, P]
        else:
            w = w_ref[i]                       # [P, P]
        acc = jnp.dot(h, w, preferred_element_type=jnp.float32)
        acc = acc + b_ref[i].astype(jnp.float32)     # [1, P] broadcast, f32
        act = gelu(acc)                              # f32 activations
        if i + 1 < n_layers:
            h = act.astype(mm_dtype)
    if d_out != pad_width:
        act = act[:, :d_out]
    o_ref[...] = act.astype(o_ref.dtype)


# -----------------------------------------------------------------------------
# Parameter packing: zero-pad every [in, out] weight / [1, out] bias and stack.
# -----------------------------------------------------------------------------
def pack_params(weights, biases, pad_width, matmul_dtype):
    n_layers = len(weights)
    w_stack = jnp.zeros((n_layers, pad_width, pad_width), matmul_dtype)
    b_stack = jnp.zeros((n_layers, 1, pad_width), jnp.float32)   # biases stay f32
    for i, (w, b) in enumerate(zip(weights, biases)):
        d_i, d_o = w.shape
        w_stack = w_stack.at[i, :d_i, :d_o].set(w.astype(matmul_dtype))
        b_stack = b_stack.at[i, 0, :d_o].set(b.reshape(-1).astype(jnp.float32))
    return w_stack, b_stack


# -----------------------------------------------------------------------------
# Wrapper
# -----------------------------------------------------------------------------
def autoencoder_forward(x, weights, biases, *, block_batch=512,
                        matmul_dtype=jnp.bfloat16, approximate_gelu=False):
    """Batch-tiled, lane-padded fused forward pass.

    matmul_dtype: MXU operand dtype (accumulation always f32).
      bf16 (default) -> single-pass MXU; jnp.float32 -> exact-parity mode.
    approximate_gelu: tanh GELU on the EUP (changes numerics vs torch default).
    """
    B, d_in = x.shape
    assert d_in == weights[0].shape[0]
    d_out = weights[-1].shape[1]
    n_layers = len(weights)
    all_dims = [w.shape[0] for w in weights] + [w.shape[1] for w in weights]
    pad_width = _round_up(max(all_dims), 128)          # lane-dense width P (=128 here)

    w_stack, b_stack = pack_params(weights, biases, pad_width, matmul_dtype)

    # --- batch tiling --------------------------------------------------------
    # Adaptive tile: minimize dead padded rows, and force >= 2 blocks when the
    # batch allows it so v7x's two TensorCores both get work.
    tb_cap = max(8, _round_up(min(block_batch, B), 8))
    n_blocks = _cdiv(B, tb_cap)
    if n_blocks == 1 and B >= 16:
        n_blocks = 2
    tb = _round_up(_cdiv(B, n_blocks), 8)
    n_blocks = _cdiv(B, tb)
    grid = (n_blocks,)

    # --- VMEM budget (explicit limit instead of the scoped default) ----------
    wt_isz = jnp.dtype(matmul_dtype).itemsize
    act_isz = jnp.dtype(x.dtype).itemsize
    vmem_bytes = (2 * n_layers * pad_width * pad_width * wt_isz   # weights (2 bufs)
                  + 2 * n_layers * pad_width * 4                   # biases  (2 bufs)
                  + 2 * tb * d_in * act_isz                        # in tiles
                  + 2 * tb * d_out * act_isz                       # out tiles
                  + 6 * tb * pad_width * 4)                        # kernel temporaries
    vmem_limit = int(min(max(2 * vmem_bytes, 32 * 1024 * 1024), 120 * 1024 * 1024))
    # TODO(synk): beyond pad_width ~1024 (bf16, ~8 layers) the resident weight
    # stack no longer fits v7x's 64 MiB VMEM; switch to streaming weights over an
    # "arbitrary" layer grid axis in that regime.

    flops = 2 * n_blocks * tb * (d_in * pad_width
                                 + (n_layers - 1) * pad_width * pad_width)
    transcendentals = n_blocks * tb * n_layers * pad_width
    bytes_accessed = (B * d_in * act_isz + w_stack.size * wt_isz
                      + b_stack.size * 4 + B * d_out * act_isz)

    kernel = functools.partial(autoencoder_kernel, d_in=d_in, d_out=d_out,
                               approximate_gelu=approximate_gelu)

    out = pl.pallas_call(
        kernel,
        out_shape=jax.ShapeDtypeStruct((B, d_out), x.dtype),
        grid=grid,
        in_specs=[
            # activation tile: new block per grid step (double-buffered DMA)
            pl.BlockSpec((tb, d_in), lambda i: (i, 0)),
            # weight / bias stacks: same block every step -> stay VMEM-resident
            pl.BlockSpec((n_layers, pad_width, pad_width), lambda i: (0, 0, 0)),
            pl.BlockSpec((n_layers, 1, pad_width), lambda i: (0, 0, 0)),
        ],
        out_specs=pl.BlockSpec((tb, d_out), lambda i: (i, 0)),
        compiler_params=pltpu.CompilerParams(
            dimension_semantics=("parallel",),          # v7x: shard batch over 2 TCs
            vmem_limit_bytes=vmem_limit),
        cost_estimate=pl.CostEstimate(
            flops=flops,
            transcendentals=transcendentals,
            bytes_accessed=bytes_accessed),
    )(x, w_stack, b_stack)
    return out


# -----------------------------------------------------------------------------
# Reference / init helpers
# -----------------------------------------------------------------------------
def init_params(layer_dims, key):
    """torch.nn.Linear-style init: U(-1/sqrt(fan_in), 1/sqrt(fan_in)) for W and b.
    Returns encoder layers then decoder layers, weights stored as [in, out]."""
    layer_in_out = []
    for i in range(1, len(layer_dims)):                      # encoder
        layer_in_out.append((layer_dims[i - 1], layer_dims[i]))
    for i in range(len(layer_dims) - 1, 0, -1):              # decoder
        layer_in_out.append((layer_dims[i], layer_dims[i - 1]))

    weights, biases = [], []
    for (d_in, d_out) in layer_in_out:
        key, kw, kb = jax.random.split(key, 3)
        bound = 1.0 / math.sqrt(d_in)
        weights.append(jax.random.uniform(kw, (d_in, d_out), jnp.float32, -bound, bound))
        biases.append(jax.random.uniform(kb, (1, d_out), jnp.float32, -bound, bound))
    return weights, biases


def reference_forward(x, weights, biases):
    """Pure-JAX f32 reference of the PyTorch forward (Linear + exact GELU chain)."""
    h = x.astype(jnp.float32)
    for w, b in zip(weights, biases):
        h = jnp.dot(h, w, precision=jax.lax.Precision.HIGHEST) + b
        h = _gelu_exact(h)
    return h.astype(x.dtype)


if __name__ == "__main__":
    original_dim = 64
    latent_dim = 16
    batch = 8

    layer_dims = build_layer_dimensions(original_dim, latent_dim, 0.3)
    # -> [64, 50, 36, 22, 16]: encoder 4 layers, decoder 4 layers

    key = jax.random.PRNGKey(0)
    key, kx = jax.random.split(key)
    x = jax.random.normal(kx, (batch, original_dim), jnp.float32)
    weights, biases = init_params(layer_dims, key)

    ref = reference_forward(x, weights, biases)

    # Default fast path: bf16 MXU operands, f32 accumulation, exact GELU.
    out = jax.block_until_ready(autoencoder_forward(x, weights, biases))
    assert out.shape == (batch, original_dim), out.shape
    assert out.dtype == jnp.float32
    assert bool(jnp.all(jnp.isfinite(out)))
    assert bool(jnp.allclose(out, ref, rtol=7.5e-2, atol=7.5e-2)), (
        float(jnp.max(jnp.abs(out - ref))))

    # f32 parity mode: tight agreement with the PyTorch-style f32 forward.
    out_f32 = jax.block_until_ready(
        autoencoder_forward(x, weights, biases, matmul_dtype=jnp.float32))
    assert bool(jnp.allclose(out_f32, ref, rtol=1e-3, atol=1e-3)), (
        float(jnp.max(jnp.abs(out_f32 - ref))))

    # Gated approximate-GELU (EUP tanh) path: compile/run check only.
    out_approx = jax.block_until_ready(
        autoencoder_forward(x, weights, biases, approximate_gelu=True))
    assert bool(jnp.all(jnp.isfinite(out_approx)))

    print("KERNEL_OK")
</pallas_src>

<mosaic_0001>
module attributes {stable_mosaic.version = 11 : i64} {
  func.func @autoencoder_kernel(%arg0: i32, %arg1: memref<8x64xf32, #tpu.memory_space<vmem>>, %arg2: memref<8x128x128xbf16, #tpu.memory_space<vmem>>, %arg3: memref<8x1x128xf32, #tpu.memory_space<vmem>>, %arg4: memref<8x64xf32, #tpu.memory_space<vmem>>) attributes {dimension_semantics = [#tpu.dimension_semantics<parallel>], iteration_bounds = array<i64: 1>, scalar_prefetch = 0 : i64, scratch_operands = 0 : i64, tpu.core_type = #tpu.core_type<tc>, window_params = [{transform_indices = @transform_0, window_bounds = array<i64: 8, 64>}, {pipeline_mode = #tpu.pipeline_mode<synchronous>, transform_indices = @transform_1, window_bounds = array<i64: 8, 128, 128>}, {pipeline_mode = #tpu.pipeline_mode<synchronous>, transform_indices = @transform_2, window_bounds = array<i64: 8, 1, 128>}, {transform_indices = @transform_3, window_bounds = array<i64: 8, 64>}]} {
    %c0 = arith.constant 0 : index
    %c0_0 = arith.constant 0 : index
    %0 = vector.load %arg1[%c0, %c0_0] : memref<8x64xf32, #tpu.memory_space<vmem>>, vector<8x64xf32>
    %1 = arith.truncf %0 : vector<8x64xf32> to vector<8x64xbf16>
    %c0_1 = arith.constant 0 : index
    %c0_2 = arith.constant 0 : index
    %c0_3 = arith.constant 0 : index
    %2 = vector.load %arg2[%c0_1, %c0_2, %c0_3] : memref<8x128x128xbf16, #tpu.memory_space<vmem>>, vector<1x64x128xbf16>
    %3 = vector.shape_cast %2 : vector<1x64x128xbf16> to vector<64x128xbf16>
    %cst = arith.constant dense<0.000000e+00> : vector<8x128xf32>
    %4 = tpu.matmul %1, %3, %cst {dimension_numbers = #tpu.dot_dimension_numbers<[1], [0], [0], [1], [0, 0, 1, 1], [], []>} : vector<8x64xbf16>, vector<64x128xbf16>, vector<8x128xf32> -> vector<8x128xf32>
    %c0_4 = arith.constant 0 : index
    %c0_5 = arith.constant 0 : index
    %c0_6 = arith.constant 0 : index
    %5 = vector.load %arg3[%c0_4, %c0_5, %c0_6] : memref<8x1x128xf32, #tpu.memory_space<vmem>>, vector<1x1x128xf32>
    %6 = vector.shape_cast %5 : vector<1x1x128xf32> to vector<1x128xf32>
    %7 = vector.broadcast %6 : vector<1x128xf32> to vector<8x128xf32>
    %8 = arith.addf %4, %7 : vector<8x128xf32>
    %cst_7 = arith.constant 5.000000e-01 : f32
    %9 = vector.broadcast %cst_7 : f32 to vector<8x128xf32>
    %10 = arith.mulf %9, %8 : vector<8x128xf32>
    %cst_8 = arith.constant 0.707106769 : f32
    %11 = vector.broadcast %cst_8 : f32 to vector<8x128xf32>
    %12 = arith.mulf %8, %11 : vector<8x128xf32>
    %13 = math.erf %12 : vector<8x128xf32>
    %cst_9 = arith.constant 1.000000e+00 : f32
    %14 = vector.broadcast %cst_9 : f32 to vector<8x128xf32>
    %15 = arith.addf %14, %13 : vector<8x128xf32>
    %16 = arith.mulf %10, %15 : vector<8x128xf32>
    %17 = arith.truncf %16 : vector<8x128xf32> to vector<8x128xbf16>
    %c1 = arith.constant 1 : index
    %c0_10 = arith.constant 0 : index
    %c0_11 = arith.constant 0 : index
    %18 = vector.load %arg2[%c1, %c0_10, %c0_11] : memref<8x128x128xbf16, #tpu.memory_space<vmem>>, vector<1x128x128xbf16>
    %19 = vector.shape_cast %18 : vector<1x128x128xbf16> to vector<128x128xbf16>
    %cst_12 = arith.constant dense<0.000000e+00> : vector<8x128xf32>
    %20 = tpu.matmul %17, %19, %cst_12 {dimension_numbers = #tpu.dot_dimension_numbers<[1], [0], [0], [1], [0, 0, 1, 1], [], []>} : vector<8x128xbf16>, vector<128x128xbf16>, vector<8x128xf32> -> vector<8x128xf32>
    %c1_13 = arith.constant 1 : index
    %c0_14 = arith.constant 0 : index
    %c0_15 = arith.constant 0 : index
    %21 = vector.load %arg3[%c1_13, %c0_14, %c0_15] : memref<8x1x128xf32, #tpu.memory_space<vmem>>, vector<1x1x128xf32>
    %22 = vector.shape_cast %21 : vector<1x1x128xf32> to vector<1x128xf32>
    %23 = vector.broadcast %22 : vector<1x128xf32> to vector<8x128xf32>
    %24 = arith.addf %20, %23 : vector<8x128xf32>
    %cst_16 = arith.constant 5.000000e-01 : f32
    %25 = vector.broadcast %cst_16 : f32 to vector<8x128xf32>
    %26 = arith.mulf %25, %24 : vector<8x128xf32>
    %cst_17 = arith.constant 0.707106769 : f32
    %27 = vector.broadcast %cst_17 : f32 to vector<8x128xf32>
    %28 = arith.mulf %24, %27 : vector<8x128xf32>
    %29 = math.erf %28 : vector<8x128xf32>
    %cst_18 = arith.constant 1.000000e+00 : f32
    %30 = vector.broadcast %cst_18 : f32 to vector<8x128xf32>
    %31 = arith.addf %30, %29 : vector<8x128xf32>
    %32 = arith.mulf %26, %31 : vector<8x128xf32>
    %33 = arith.truncf %32 : vector<8x128xf32> to vector<8x128xbf16>
    %c2 = arith.constant 2 : index
    %c0_19 = arith.constant 0 : index
    %c0_20 = arith.constant 0 : index
    %34 = vector.load %arg2[%c2, %c0_19, %c0_20] : memref<8x128x128xbf16, #tpu.memory_space<vmem>>, vector<1x128x128xbf16>
    %35 = vector.shape_cast %34 : vector<1x128x128xbf16> to vector<128x128xbf16>
    %cst_21 = arith.constant dense<0.000000e+00> : vector<8x128xf32>
    %36 = tpu.matmul %33, %35, %cst_21 {dimension_numbers = #tpu.dot_dimension_numbers<[1], [0], [0], [1], [0, 0, 1, 1], [], []>} : vector<8x128xbf16>, vector<128x128xbf16>, vector<8x128xf32> -> vector<8x128xf32>
    %c2_22 = arith.constant 2 : index
    %c0_23 = arith.constant 0 : index
    %c0_24 = arith.constant 0 : index
    %37 = vector.load %arg3[%c2_22, %c0_23, %c0_24] : memref<8x1x128xf32, #tpu.memory_space<vmem>>, vector<1x1x128xf32>
    %38 = vector.shape_cast %37 : vector<1x1x128xf32> to vector<1x128xf32>
    %39 = vector.broadcast %38 : vector<1x128xf32> to vector<8x128xf32>
    %40 = arith.addf %36, %39 : vector<8x128xf32>
    %cst_25 = arith.constant 5.000000e-01 : f32
    %41 = vector.broadcast %cst_25 : f32 to vector<8x128xf32>
    %42 = arith.mulf %41, %40 : vector<8x128xf32>
    %cst_26 = arith.constant 0.707106769 : f32
    %43 = vector.broadcast %cst_26 : f32 to vector<8x128xf32>
    %44 = arith.mulf %40, %43 : vector<8x128xf32>
    %45 = math.erf %44 : vector<8x128xf32>
    %cst_27 = arith.constant 1.000000e+00 : f32
    %46 = vector.broadcast %cst_27 : f32 to vector<8x128xf32>
    %47 = arith.addf %46, %45 : vector<8x128xf32>
    %48 = arith.mulf %42, %47 : vector<8x128xf32>
    %49 = arith.truncf %48 : vector<8x128xf32> to vector<8x128xbf16>
    %c3 = arith.constant 3 : index
    %c0_28 = arith.constant 0 : index
    %c0_29 = arith.constant 0 : index
    %50 = vector.load %arg2[%c3, %c0_28, %c0_29] : memref<8x128x128xbf16, #tpu.memory_space<vmem>>, vector<1x128x128xbf16>
    %51 = vector.shape_cast %50 : vector<1x128x128xbf16> to vector<128x128xbf16>
    %cst_30 = arith.constant dense<0.000000e+00> : vector<8x128xf32>
    %52 = tpu.matmul %49, %51, %cst_30 {dimension_numbers = #tpu.dot_dimension_numbers<[1], [0], [0], [1], [0, 0, 1, 1], [], []>} : vector<8x128xbf16>, vector<128x128xbf16>, vector<8x128xf32> -> vector<8x128xf32>
    %c3_31 = arith.constant 3 : index
    %c0_32 = arith.constant 0 : index
    %c0_33 = arith.constant 0 : index
    %53 = vector.load %arg3[%c3_31, %c0_32, %c0_33] : memref<8x1x128xf32, #tpu.memory_space<vmem>>, vector<1x1x128xf32>
    %54 = vector.shape_cast %53 : vector<1x1x128xf32> to vector<1x128xf32>
    %55 = vector.broadcast %54 : vector<1x128xf32> to vector<8x128xf32>
    %56 = arith.addf %52, %55 : vector<8x128xf32>
    %cst_34 = arith.constant 5.000000e-01 : f32
    %57 = vector.broadcast %cst_34 : f32 to vector<8x128xf32>
    %58 = arith.mulf %57, %56 : vector<8x128xf32>
    %cst_35 = arith.constant 0.707106769 : f32
    %59 = vector.broadcast %cst_35 : f32 to vector<8x128xf32>
    %60 = arith.mulf %56, %59 : vector<8x128xf32>
    %61 = math.erf %60 : vector<8x128xf32>
    %cst_36 = arith.constant 1.000000e+00 : f32
    %62 = vector.broadcast %cst_36 : f32 to vector<8x128xf32>
    %63 = arith.addf %62, %61 : vector<8x128xf32>
    %64 = arith.mulf %58, %63 : vector<8x128xf32>
    %65 = arith.truncf %64 : vector<8x128xf32> to vector<8x128xbf16>
    %c4 = arith.constant 4 : index
    %c0_37 = arith.constant 0 : index
    %c0_38 = arith.constant 0 : index
    %66 = vector.load %arg2[%c4, %c0_37, %c0_38] : memref<8x128x128xbf16, #tpu.memory_space<vmem>>, vector<1x128x128xbf16>
    %67 = vector.shape_cast %66 : vector<1x128x128xbf16> to vector<128x128xbf16>
    %cst_39 = arith.constant dense<0.000000e+00> : vector<8x128xf32>
    %68 = tpu.matmul %65, %67, %cst_39 {dimension_numbers = #tpu.dot_dimension_numbers<[1], [0], [0], [1], [0, 0, 1, 1], [], []>} : vector<8x128xbf16>, vector<128x128xbf16>, vector<8x128xf32> -> vector<8x128xf32>
    %c4_40 = arith.constant 4 : index
    %c0_41 = arith.constant 0 : index
    %c0_42 = arith.constant 0 : index
    %69 = vector.load %arg3[%c4_40, %c0_41, %c0_42] : memref<8x1x128xf32, #tpu.memory_space<vmem>>, vector<1x1x128xf32>
    %70 = vector.shape_cast %69 : vector<1x1x128xf32> to vector<1x128xf32>
    %71 = vector.broadcast %70 : vector<1x128xf32> to vector<8x128xf32>
    %72 = arith.addf %68, %71 : vector<8x128xf32>
    %cst_43 = arith.constant 5.000000e-01 : f32
    %73 = vector.broadcast %cst_43 : f32 to vector<8x128xf32>
    %74 = arith.mulf %73, %72 : vector<8x128xf32>
    %cst_44 = arith.constant 0.707106769 : f32
    %75 = vector.broadcast %cst_44 : f32 to vector<8x128xf32>
    %76 = arith.mulf %72, %75 : vector<8x128xf32>
    %77 = math.erf %76 : vector<8x128xf32>
    %cst_45 = arith.constant 1.000000e+00 : f32
    %78 = vector.broadcast %cst_45 : f32 to vector<8x128xf32>
    %79 = arith.addf %78, %77 : vector<8x128xf32>
    %80 = arith.mulf %74, %79 : vector<8x128xf32>
    %81 = arith.truncf %80 : vector<8x128xf32> to vector<8x128xbf16>
    %c5 = arith.constant 5 : index
    %c0_46 = arith.constant 0 : index
    %c0_47 = arith.constant 0 : index
    %82 = vector.load %arg2[%c5, %c0_46, %c0_47] : memref<8x128x128xbf16, #tpu.memory_space<vmem>>, vector<1x128x128xbf16>
    %83 = vector.shape_cast %82 : vector<1x128x128xbf16> to vector<128x128xbf16>
    %cst_48 = arith.constant dense<0.000000e+00> : vector<8x128xf32>
    %84 = tpu.matmul %81, %83, %cst_48 {dimension_numbers = #tpu.dot_dimension_numbers<[1], [0], [0], [1], [0, 0, 1, 1], [], []>} : vector<8x128xbf16>, vector<128x128xbf16>, vector<8x128xf32> -> vector<8x128xf32>
    %c5_49 = arith.constant 5 : index
    %c0_50 = arith.constant 0 : index
    %c0_51 = arith.constant 0 : index
    %85 = vector.load %arg3[%c5_49, %c0_50, %c0_51] : memref<8x1x128xf32, #tpu.memory_space<vmem>>, vector<1x1x128xf32>
    %86 = vector.shape_cast %85 : vector<1x1x128xf32> to vector<1x128xf32>
    %87 = vector.broadcast %86 : vector<1x128xf32> to vector<8x128xf32>
    %88 = arith.addf %84, %87 : vector<8x128xf32>
    %cst_52 = arith.constant 5.000000e-01 : f32
    %89 = vector.broadcast %cst_52 : f32 to vector<8x128xf32>
    %90 = arith.mulf %89, %88 : vector<8x128xf32>
    %cst_53 = arith.constant 0.707106769 : f32
    %91 = vector.broadcast %cst_53 : f32 to vector<8x128xf32>
    %92 = arith.mulf %88, %91 : vector<8x128xf32>
    %93 = math.erf %92 : vector<8x128xf32>
    %cst_54 = arith.constant 1.000000e+00 : f32
    %94 = vector.broadcast %cst_54 : f32 to vector<8x128xf32>
    %95 = arith.addf %94, %93 : vector<8x128xf32>
    %96 = arith.mulf %90, %95 : vector<8x128xf32>
    %97 = arith.truncf %96 : vector<8x128xf32> to vector<8x128xbf16>
    %c6 = arith.constant 6 : index
    %c0_55 = arith.constant 0 : index
    %c0_56 = arith.constant 0 : index
    %98 = vector.load %arg2[%c6, %c0_55, %c0_56] : memref<8x128x128xbf16, #tpu.memory_space<vmem>>, vector<1x128x128xbf16>
    %99 = vector.shape_cast %98 : vector<1x128x128xbf16> to vector<128x128xbf16>
    %cst_57 = arith.constant dense<0.000000e+00> : vector<8x128xf32>
    %100 = tpu.matmul %97, %99, %cst_57 {dimension_numbers = #tpu.dot_dimension_numbers<[1], [0], [0], [1], [0, 0, 1, 1], [], []>} : vector<8x128xbf16>, vector<128x128xbf16>, vector<8x128xf32> -> vector<8x128xf32>
    %c6_58 = arith.constant 6 : index
    %c0_59 = arith.constant 0 : index
    %c0_60 = arith.constant 0 : index
    %101 = vector.load %arg3[%c6_58, %c0_59, %c0_60] : memref<8x1x128xf32, #tpu.memory_space<vmem>>, vector<1x1x128xf32>
    %102 = vector.shape_cast %101 : vector<1x1x128xf32> to vector<1x128xf32>
    %103 = vector.broadcast %102 : vector<1x128xf32> to vector<8x128xf32>
    %104 = arith.addf %100, %103 : vector<8x128xf32>
    %cst_61 = arith.constant 5.000000e-01 : f32
    %105 = vector.broadcast %cst_61 : f32 to vector<8x128xf32>
    %106 = arith.mulf %105, %104 : vector<8x128xf32>
    %cst_62 = arith.constant 0.707106769 : f32
    %107 = vector.broadcast %cst_62 : f32 to vector<8x128xf32>
    %108 = arith.mulf %104, %107 : vector<8x128xf32>
    %109 = math.erf %108 : vector<8x128xf32>
    %cst_63 = arith.constant 1.000000e+00 : f32
    %110 = vector.broadcast %cst_63 : f32 to vector<8x128xf32>
    %111 = arith.addf %110, %109 : vector<8x128xf32>
    %112 = arith.mulf %106, %111 : vector<8x128xf32>
    %113 = arith.truncf %112 : vector<8x128xf32> to vector<8x128xbf16>
    %c7 = arith.constant 7 : index
    %c0_64 = arith.constant 0 : index
    %c0_65 = arith.constant 0 : index
    %114 = vector.load %arg2[%c7, %c0_64, %c0_65] : memref<8x128x128xbf16, #tpu.memory_space<vmem>>, vector<1x128x128xbf16>
    %115 = vector.shape_cast %114 : vector<1x128x128xbf16> to vector<128x128xbf16>
    %cst_66 = arith.constant dense<0.000000e+00> : vector<8x128xf32>
    %116 = tpu.matmul %113, %115, %cst_66 {dimension_numbers = #tpu.dot_dimension_numbers<[1], [0], [0], [1], [0, 0, 1, 1], [], []>} : vector<8x128xbf16>, vector<128x128xbf16>, vector<8x128xf32> -> vector<8x128xf32>
    %c7_67 = arith.constant 7 : index
    %c0_68 = arith.constant 0 : index
    %c0_69 = arith.constant 0 : index
    %117 = vector.load %arg3[%c7_67, %c0_68, %c0_69] : memref<8x1x128xf32, #tpu.memory_space<vmem>>, vector<1x1x128xf32>
    %118 = vector.shape_cast %117 : vector<1x1x128xf32> to vector<1x128xf32>
    %119 = vector.broadcast %118 : vector<1x128xf32> to vector<8x128xf32>
    %120 = arith.addf %116, %119 : vector<8x128xf32>
    %cst_70 = arith.constant 5.000000e-01 : f32
    %121 = vector.broadcast %cst_70 : f32 to vector<8x128xf32>
    %122 = arith.mulf %121, %120 : vector<8x128xf32>
    %cst_71 = arith.constant 0.707106769 : f32
    %123 = vector.broadcast %cst_71 : f32 to vector<8x128xf32>
    %124 = arith.mulf %120, %123 : vector<8x128xf32>
    %125 = math.erf %124 : vector<8x128xf32>
    %cst_72 = arith.constant 1.000000e+00 : f32
    %126 = vector.broadcast %cst_72 : f32 to vector<8x128xf32>
    %127 = arith.addf %126, %125 : vector<8x128xf32>
    %128 = arith.mulf %122, %127 : vector<8x128xf32>
    %129 = vector.extract_strided_slice %128 {offsets = [0, 0], sizes = [8, 64], strides = [1, 1]} : vector<8x128xf32> to vector<8x64xf32>
    %c0_73 = arith.constant 0 : index
    %c0_74 = arith.constant 0 : index
    %130 = vector.load %arg4[%c0_73, %c0_74] : memref<8x64xf32, #tpu.memory_space<vmem>>, vector<8x64xf32>
    tpu.vector_store %arg4[%c0_73, %c0_74], %129 {strides = array<i32>} : memref<8x64xf32, #tpu.memory_space<vmem>>, vector<8x64xf32>,
    return
  }
  func.func @transform_0(%arg0: i32) -> (i32, i32) {
    %c0_i32 = arith.constant 0 : i32
    %c0_i32_0 = arith.constant 0 : i32
    return %arg0, %c0_i32 : i32, i32
  }
  func.func @transform_1(%arg0: i32) -> (i32, i32, i32) {
    %c0_i32 = arith.constant 0 : i32
    %c0_i32_0 = arith.constant 0 : i32
    %c0_i32_1 = arith.constant 0 : i32
    %c0_i32_2 = arith.constant 0 : i32
    return %c0_i32, %c0_i32_0, %c0_i32_1 : i32, i32, i32
  }
  func.func @transform_2(%arg0: i32) -> (i32, i32, i32) {
    %c0_i32 = arith.constant 0 : i32
    %c0_i32_0 = arith.constant 0 : i32
    %c0_i32_1 = arith.constant 0 : i32
    %c0_i32_2 = arith.constant 0 : i32
    return %c0_i32, %c0_i32_0, %c0_i32_1 : i32, i32, i32
  }
  func.func @transform_3(%arg0: i32) -> (i32, i32) {
    %c0_i32 = arith.constant 0 : i32
    %c0_i32_0 = arith.constant 0 : i32
    return %arg0, %c0_i32 : i32, i32
  }
}

</mosaic_0001>

<llo_original>
// kernel: tpu_custom_call.1
$region0: #{tpu_custom_call.1}
  #allocation0 [shape = 'u32[]', space=smem, size = 0x4, offset = 0x4, fixed_abs, tag = 'smem constant byte address 0x4 - core index']
  #allocation1 [shape = 'u32[144,128]{1,0:T(1,128)}', space=vmem, size = 0x12000, scoped, tag = 'internal scratch']
  %s0 = inlined_call_operand.hbm [shape: f32[8,64], index: 0, kind: input, shape index: {}]
  %s1 = inlined_call_operand.hbm [shape: bf16[8,128,128], index: 1, kind: input, shape index: {}]
  %s2 = inlined_call_operand.hbm [shape: f32[8,1,128], index: 2, kind: input, shape index: {}]
  %s3 = inlined_call_operand.hbm [shape: f32[8,64], index: 3, kind: output, shape index: {}]
  %s4 = sld [smem:[#allocation0]]
  $region34: #{tpu_custom_call.1} parent=0
    _
  %s6 = ssub.s32 1, %s4
  %s7 = scalar_select 0, %s6, %s4
  $region1: #{tpu_custom_call.1} parent=0
    #allocation2 [shape = 'u8[4096]{0}', space=vmem, size = 0x1000, scoped, tag = 'input window, operand 0, single buffered']
    #allocation3 [shape = 's32[1]{0}', space=sflag, size = 0x4, scoped, tag = 'scoped memory for tpu_custom_call.1']
    #allocation4 [shape = 's32[1]{0}', space=sflag, size = 0x4, scoped, tag = 'scoped memory for tpu_custom_call.1']
    #allocation5 [shape = 'u8[262144]{0}', space=vmem, size = 0x40000, scoped, tag = 'input window, operand 1, single buffered']
    #allocation6 [shape = 's32[1]{0}', space=sflag, size = 0x4, scoped, tag = 'scoped memory for tpu_custom_call.1']
    #allocation7 [shape = 'u8[4096]{0}', space=vmem, size = 0x1000, scoped, tag = 'input window, operand 2, single buffered']
    #allocation8 [shape = 'u8[4096]{0}', space=vmem, size = 0x1000, scoped, tag = 'output window, operand 0, single buffered']
    %8 = vsyncpa [#allocation3], 0
    %9 = vsyncpa [#allocation6], 0
    %10 = vsyncpa [#allocation4], 0
    // Predicated region
    $region2: #{tpu_custom_call.1} parent=1 // pred_check
      _
    $region3: #{tpu_custom_call.1} parent=1 // pred_check_branch
      %12 = sbr.rel (0) target = $region5
    $region4: #{tpu_custom_call.1} parent=1 // pred_region
      %s14 = ssub.s32 128, 128
      %15 = vsyncadd [#allocation3], %s14
      %s17 = sshll.u32 [#allocation2], 4
      %s18 = int_to_ptr.vmem [resolvable:$true] %s17
      %20 = dma.hbm_to_vmem [thread:$0]  %s0, 128, %s18, [#allocation3]
    $region5: #{tpu_custom_call.1} parent=1 // pred_fallthru
      _
    // Predicated region
    $region6: #{tpu_custom_call.1} parent=1 // pred_check
      _
    $region7: #{tpu_custom_call.1} parent=1 // pred_check_branch
      %22 = sbr.rel (0) target = $region9
    $region8: #{tpu_custom_call.1} parent=1 // pred_region
      %s24 = ssub.s32 8192, 8192
      %25 = vsyncadd [#allocation6], %s24
      %s26 = sshll.u32 [#allocation5], 4
      %s27 = int_to_ptr.vmem [resolvable:$true] %s26
      %32 = dma.hbm_to_vmem [thread:$0]  %s1, 8192, %s27, [#allocation6], 64, 64, 4
    $region9: #{tpu_custom_call.1} parent=1 // pred_fallthru
      _
    // Predicated region
    $region10: #{tpu_custom_call.1} parent=1 // pred_check
      _
    $region11: #{tpu_custom_call.1} parent=1 // pred_check_branch
      %34 = sbr.rel (0) target = $region13
    $region12: #{tpu_custom_call.1} parent=1 // pred_region
      %s36 = ssub.s32 128, 128
      %37 = vsyncadd [#allocation6], %s36
      %s38 = sshll.u32 [#allocation7], 4
      %s39 = int_to_ptr.vmem [resolvable:$true] %s38
      %44 = dma.hbm_to_vmem [thread:$0]  %s2, 128, %s39, [#allocation6], 16, 16, 1
    $region13: #{tpu_custom_call.1} parent=1 // pred_fallthru
      _
    // Predicated region
    $region14: #{tpu_custom_call.1} parent=1 // pred_check
      _
    $region15: #{tpu_custom_call.1} parent=1 // pred_check_branch
      %46 = sbr.rel (0) target = $region17
    $region16: #{tpu_custom_call.1} parent=1 // pred_region
      %47 = dma.done [#allocation3], 128
    $region17: #{tpu_custom_call.1} parent=1 // pred_fallthru
      _
    // Predicated region
    $region18: #{tpu_custom_call.1} parent=1 // pred_check
      _
    $region19: #{tpu_custom_call.1} parent=1 // pred_check_branch
      %49 = sbr.rel (0) target = $region21
    $region20: #{tpu_custom_call.1} parent=1 // pred_region
      %50 = dma.done [#allocation6], 8192
    $region21: #{tpu_custom_call.1} parent=1 // pred_fallthru
      _
    // Predicated region
    $region22: #{tpu_custom_call.1} parent=1 // pred_check
      _
    $region23: #{tpu_custom_call.1} parent=1 // pred_check_branch
      %52 = sbr.rel (0) target = $region25
    $region24: #{tpu_custom_call.1} parent=1 // pred_region
      %53 = dma.done [#allocation6], 128
    $region25: #{tpu_custom_call.1} parent=1 // pred_fallthru
      _
    %v55 = vld [vmem:[#allocation2] sm:$0xff]
    %v56 = vpack.c.bf16 %v55, %v55
    %v57 = vld [vmem:[#allocation5] sm:$0xf]
    %v58 = vld [vmem:[#allocation5 + $0x4] sm:$0xf]
    %v59 = vld [vmem:[#allocation5 + $0x8] sm:$0xf]
    %v60 = vld [vmem:[#allocation5 + $0xc] sm:$0xf]
    %v61 = vld [vmem:[#allocation5 + $0x10] sm:$0xf]
    %v62 = vld [vmem:[#allocation5 + $0x14] sm:$0xf]
    %v63 = vld [vmem:[#allocation5 + $0x18] sm:$0xf]
    %v64 = vld [vmem:[#allocation5 + $0x1c] sm:$0xf]
    %v65 = vld [vmem:[#allocation7] sm:$0x1]
    %v67 = vlaneseq
    %v68 = vshrl.u32 %v67, 7
    %v69 = vsub.s32 0, %v68
    %v70 = vrot.slane %v65, %v69
    %v80 = vunpack.c.l.b16 %v57
    %v81 = vunpack.c.l.b16 %v58
    %v82 = vunpack.c.l.b16 %v59
    %v83 = vunpack.c.l.b16 %v60
    %v84 = vunpack.c.l.b16 %v61
    %v85 = vunpack.c.l.b16 %v62
    %v86 = vunpack.c.l.b16 %v63
    %v87 = vunpack.c.l.b16 %v64
    %v88 = vpack.c.b16 %v81, %v80
    %v89 = vpack.c.b16 %v83, %v82
    %v90 = vpack.c.b16 %v85, %v84
    %v91 = vpack.c.b16 %v87, %v86
    %vm96 = vcmask 523264
    %v98 = vsel %vm96, %v56, 0
    %100 = vmatprep.subr.bf16.mxu0 0
    %101 = vmatpush1.bf16.msra.mxu0 %v88
    %102 = vmatprep.subr.bf16.mxu0 0
    %103 = vmatpush1.bf16.msra.mxu0 %v89
    %104 = vmatprep.subr.bf16.mxu0 0
    %105 = vmatpush1.bf16.msra.mxu0 %v90
    %106 = vmatprep.subr.bf16.mxu0 0
    %107 = vmatpush1.bf16.msra.mxu0 %v91
    %108 = vmatprep.subr.bf16.mxu0 0
    %109 = vmatpush1.bf16.msra.mxu0 0
    %110 = vmatprep.subr.bf16.mxu0 0
    %111 = vmatpush1.bf16.msra.mxu0 0
    %112 = vmatprep.subr.bf16.mxu0 0
    %113 = vmatpush1.bf16.msra.mxu0 0
    %114 = vmatprep.subr.bf16.mxu0 0
    %115 = vmatpush1.bf16.msra.mxu0 0
    %116 = vmatprep.subr.bf16.mxu0 0
    %117 = vmatpush1.bf16.msra.mxu0 0
    %118 = vmatprep.subr.bf16.mxu0 0
    %119 = vmatpush1.bf16.msra.mxu0 0
    %120 = vmatprep.subr.bf16.mxu0 0
    %121 = vmatpush1.bf16.msra.mxu0 0
    %122 = vmatprep.subr.bf16.mxu0 0
    %123 = vmatpush1.bf16.msra.mxu0 0
    %124 = vmatprep.subr.bf16.mxu0 0
    %125 = vmatpush1.bf16.msra.mxu0 0
    %126 = vmatprep.subr.bf16.mxu0 0
    %127 = vmatpush1.bf16.msra.mxu0 0
    %128 = vmatprep.subr.bf16.mxu0 0
    %129 = vmatpush1.bf16.msra.mxu0 0
    %130 = vmatprep.subr.bf16.mxu0 0
    %131 = vmatpush1.bf16.msra.mxu0 0
    %132 = vmatprep.mubr.bf16.mxu0 0
    %133 = vmatmul.mubr.bf16.gmra.mrb[0].mxu0 %v98
    %v134 = vpop.f32.mrb[0].mxu0
    %v135 = vadd.f32 %v70, %v134
    %v136 = vpop.f32.mrb[0].mxu0
    %v137 = vpop.f32.mrb[0].mxu0
    %v138 = vpop.f32.mrb[0].mxu0
    %139 = vdwg.mxu0
    %v140 = vmul.f32 %v135, 0.5
    %v141 = vmul.f32 %v135, 0.70710677
    %v142 = verf.f32.pop %v141
    %v143 = vadd.f32 %v142, 1.0
    %v144 = vmul.f32 %v140, %v143
    %v145 = vpack.c.bf16 %v144, %v144
    %s146 = scalar_lea.vmem [#allocation5], 64
    %v147 = vld [vmem:[%s146] sm:$0xf]
    %v148 = vld [vmem:[%s146 + $0x4] sm:$0xf]
    %v149 = vld [vmem:[%s146 + $0x8] sm:$0xf]
    %v150 = vld [vmem:[%s146 + $0xc] sm:$0xf]
    %v151 = vld [vmem:[%s146 + $0x10] sm:$0xf]
    %v152 = vld [vmem:[%s146 + $0x14] sm:$0xf]
    %v153 = vld [vmem:[%s146 + $0x18] sm:$0xf]
    %v154 = vld [vmem:[%s146 + $0x1c] sm:$0xf]
    %v155 = vld [vmem:[%s146 + $0x20] sm:$0xf]
    %v156 = vld [vmem:[%s146 + $0x24] sm:$0xf]
    %v157 = vld [vmem:[%s146 + $0x28] sm:$0xf]
    %v158 = vld [vmem:[%s146 + $0x2c] sm:$0xf]
    %v159 = vld [vmem:[%s146 + $0x30] sm:$0xf]
    %v160 = vld [vmem:[%s146 + $0x34] sm:$0xf]
    %v161 = vld [vmem:[%s146 + $0x38] sm:$0xf]
    %v162 = vld [vmem:[%s146 + $0x3c] sm:$0xf]
    %s163 = scalar_lea.vmem [#allocation7], 1
    %v164 = vld [vmem:[%s163] sm:$0x1]
    %v166 = vlaneseq
    %v167 = vshrl.u32 %v166, 7
    %v168 = vsub.s32 0, %v167
    %v169 = vrot.slane %v164, %v168
    %v187 = vunpack.c.l.b16 %v147
    %v188 = vunpack.c.l.b16 %v148
    %v189 = vunpack.c.l.b16 %v149
    %v190 = vunpack.c.l.b16 %v150
    %v191 = vunpack.c.l.b16 %v151
    %v192 = vunpack.c.l.b16 %v152
    %v193 = vunpack.c.l.b16 %v153
    %v194 = vunpack.c.l.b16 %v154
    %v195 = vunpack.c.l.b16 %v155
    %v196 = vunpack.c.l.b16 %v156
    %v197 = vunpack.c.l.b16 %v157
    %v198 = vunpack.c.l.b16 %v158
    %v199 = vunpack.c.l.b16 %v159
    %v200 = vunpack.c.l.b16 %v160
    %v201 = vunpack.c.l.b16 %v161
    %v202 = vunpack.c.l.b16 %v162
    %v203 = vpack.c.b16 %v188, %v187
    %v204 = vpack.c.b16 %v190, %v189
    %v205 = vpack.c.b16 %v192, %v191
    %v206 = vpack.c.b16 %v194, %v193
    %v207 = vpack.c.b16 %v196, %v195
    %v208 = vpack.c.b16 %v198, %v197
    %v209 = vpack.c.b16 %v200, %v199
    %v210 = vpack.c.b16 %v202, %v201
    %219 = vmatprep.subr.bf16.mxu0 0
    %220 = vmatpush1.bf16.msra.mxu0 %v203
    %221 = vmatprep.subr.bf16.mxu0 0
    %222 = vmatpush1.bf16.msra.mxu0 %v204
    %223 = vmatprep.subr.bf16.mxu0 0
    %224 = vmatpush1.bf16.msra.mxu0 %v205
    %225 = vmatprep.subr.bf16.mxu0 0
    %226 = vmatpush1.bf16.msra.mxu0 %v206
    %227 = vmatprep.subr.bf16.mxu0 0
    %228 = vmatpush1.bf16.msra.mxu0 %v207
    %229 = vmatprep.subr.bf16.mxu0 0
    %230 = vmatpush1.bf16.msra.mxu0 %v208
    %231 = vmatprep.subr.bf16.mxu0 0
    %232 = vmatpush1.bf16.msra.mxu0 %v209
    %233 = vmatprep.subr.bf16.mxu0 0
    %234 = vmatpush1.bf16.msra.mxu0 %v210
    %235 = vmatprep.subr.bf16.mxu0 0
    %236 = vmatpush1.bf16.msra.mxu0 0
    %237 = vmatprep.subr.bf16.mxu0 0
    %238 = vmatpush1.bf16.msra.mxu0 0
    %239 = vmatprep.subr.bf16.mxu0 0
    %240 = vmatpush1.bf16.msra.mxu0 0
    %241 = vmatprep.subr.bf16.mxu0 0
    %242 = vmatpush1.bf16.msra.mxu0 0
    %243 = vmatprep.subr.bf16.mxu0 0
    %244 = vmatpush1.bf16.msra.mxu0 0
    %245 = vmatprep.subr.bf16.mxu0 0
    %246 = vmatpush1.bf16.msra.mxu0 0
    %247 = vmatprep.subr.bf16.mxu0 0
    %248 = vmatpush1.bf16.msra.mxu0 0
    %249 = vmatprep.subr.bf16.mxu0 0
    %250 = vmatpush1.bf16.msra.mxu0 0
    %251 = vmatprep.mubr.bf16.mxu0 0
    %252 = vmatmul.mubr.bf16.gmra.mrb[0].mxu0 %v145
    %v253 = vpop.f32.mrb[0].mxu0
    %v254 = vadd.f32 %v169, %v253
    %v255 = vpop.f32.mrb[0].mxu0
    %v256 = vpop.f32.mrb[0].mxu0
    %v257 = vpop.f32.mrb[0].mxu0
    %258 = vdwg.mxu0
    %v259 = vmul.f32 %v254, 0.5
    %v260 = vmul.f32 %v254, 0.70710677
    %v261 = verf.f32.pop %v260
    %v262 = vadd.f32 %v261, 1.0
    %v263 = vmul.f32 %v259, %v262
    %v264 = vpack.c.bf16 %v263, %v263
    %s265 = scalar_lea.vmem [#allocation5], 128
    %v266 = vld [vmem:[%s265] sm:$0xf]
    %v267 = vld [vmem:[%s265 + $0x4] sm:$0xf]
    %v268 = vld [vmem:[%s265 + $0x8] sm:$0xf]
    %v269 = vld [vmem:[%s265 + $0xc] sm:$0xf]
    %v270 = vld [vmem:[%s265 + $0x10] sm:$0xf]
    %v271 = vld [vmem:[%s265 + $0x14] sm:$0xf]
    %v272 = vld [vmem:[%s265 + $0x18] sm:$0xf]
    %v273 = vld [vmem:[%s265 + $0x1c] sm:$0xf]
    %v274 = vld [vmem:[%s265 + $0x20] sm:$0xf]
    %v275 = vld [vmem:[%s265 + $0x24] sm:$0xf]
    %v276 = vld [vmem:[%s265 + $0x28] sm:$0xf]
    %v277 = vld [vmem:[%s265 + $0x2c] sm:$0xf]
    %v278 = vld [vmem:[%s265 + $0x30] sm:$0xf]
    %v279 = vld [vmem:[%s265 + $0x34] sm:$0xf]
    %v280 = vld [vmem:[%s265 + $0x38] sm:$0xf]
    %v281 = vld [vmem:[%s265 + $0x3c] sm:$0xf]
    %s282 = scalar_lea.vmem [#allocation7], 2
    %v283 = vld [vmem:[%s282] sm:$0x1]
    %v285 = vlaneseq
    %v286 = vshrl.u32 %v285, 7
    %v287 = vsub.s32 0, %v286
    %v288 = vrot.slane %v283, %v287
    %v306 = vunpack.c.l.b16 %v266
    %v307 = vunpack.c.l.b16 %v267
    %v308 = vunpack.c.l.b16 %v268
    %v309 = vunpack.c.l.b16 %v269
    %v310 = vunpack.c.l.b16 %v270
    %v311 = vunpack.c.l.b16 %v271
    %v312 = vunpack.c.l.b16 %v272
    %v313 = vunpack.c.l.b16 %v273
    %v314 = vunpack.c.l.b16 %v274
    %v315 = vunpack.c.l.b16 %v275
    %v316 = vunpack.c.l.b16 %v276
    %v317 = vunpack.c.l.b16 %v277
    %v318 = vunpack.c.l.b16 %v278
    %v319 = vunpack.c.l.b16 %v279
    %v320 = vunpack.c.l.b16 %v280
    %v321 = vunpack.c.l.b16 %v281
    %v322 = vpack.c.b16 %v307, %v306
    %v323 = vpack.c.b16 %v309, %v308
    %v324 = vpack.c.b16 %v311, %v310
    %v325 = vpack.c.b16 %v313, %v312
    %v326 = vpack.c.b16 %v315, %v314
    %v327 = vpack.c.b16 %v317, %v316
    %v328 = vpack.c.b16 %v319, %v318
    %v329 = vpack.c.b16 %v321, %v320
    %338 = vmatprep.subr.bf16.mxu0 0
    %339 = vmatpush1.bf16.msra.mxu0 %v322
    %340 = vmatprep.subr.bf16.mxu0 0
    %341 = vmatpush1.bf16.msra.mxu0 %v323
    %342 = vmatprep.subr.bf16.mxu0 0
    %343 = vmatpush1.bf16.msra.mxu0 %v324
    %344 = vmatprep.subr.bf16.mxu0 0
    %345 = vmatpush1.bf16.msra.mxu0 %v325
    %346 = vmatprep.subr.bf16.mxu0 0
    %347 = vmatpush1.bf16.msra.mxu0 %v326
    %348 = vmatprep.subr.bf16.mxu0 0
    %349 = vmatpush1.bf16.msra.mxu0 %v327
    %350 = vmatprep.subr.bf16.mxu0 0
    %351 = vmatpush1.bf16.msra.mxu0 %v328
    %352 = vmatprep.subr.bf16.mxu0 0
    %353 = vmatpush1.bf16.msra.mxu0 %v329
    %354 = vmatprep.subr.bf16.mxu0 0
    %355 = vmatpush1.bf16.msra.mxu0 0
    %356 = vmatprep.subr.bf16.mxu0 0
    %357 = vmatpush1.bf16.msra.mxu0 0
    %358 = vmatprep.subr.bf16.mxu0 0
    %359 = vmatpush1.bf16.msra.mxu0 0
    %360 = vmatprep.subr.bf16.mxu0 0
    %361 = vmatpush1.bf16.msra.mxu0 0
    %362 = vmatprep.subr.bf16.mxu0 0
    %363 = vmatpush1.bf16.msra.mxu0 0
    %364 = vmatprep.subr.bf16.mxu0 0
    %365 = vmatpush1.bf16.msra.mxu0 0
    %366 = vmatprep.subr.bf16.mxu0 0
    %367 = vmatpush1.bf16.msra.mxu0 0
    %368 = vmatprep.subr.bf16.mxu0 0
    %369 = vmatpush1.bf16.msra.mxu0 0
    %370 = vmatprep.mubr.bf16.mxu0 0
    %371 = vmatmul.mubr.bf16.gmra.mrb[0].mxu0 %v264
    %v372 = vpop.f32.mrb[0].mxu0
    %v373 = vadd.f32 %v288, %v372
    %v374 = vpop.f32.mrb[0].mxu0
    %v375 = vpop.f32.mrb[0].mxu0
    %v376 = vpop.f32.mrb[0].mxu0
    %377 = vdwg.mxu0
    %v378 = vmul.f32 %v373, 0.5
    %v379 = vmul.f32 %v373, 0.70710677
    %v380 = verf.f32.pop %v379
    %v381 = vadd.f32 %v380, 1.0
    %v382 = vmul.f32 %v378, %v381
    %v383 = vpack.c.bf16 %v382, %v382
    %s384 = scalar_lea.vmem [#allocation5], 192
    %v385 = vld [vmem:[%s384] sm:$0xf]
    %v386 = vld [vmem:[%s384 + $0x4] sm:$0xf]
    %v387 = vld [vmem:[%s384 + $0x8] sm:$0xf]
    %v388 = vld [vmem:[%s384 + $0xc] sm:$0xf]
    %v389 = vld [vmem:[%s384 + $0x10] sm:$0xf]
    %v390 = vld [vmem:[%s384 + $0x14] sm:$0xf]
    %v391 = vld [vmem:[%s384 + $0x18] sm:$0xf]
    %v392 = vld [vmem:[%s384 + $0x1c] sm:$0xf]
    %v393 = vld [vmem:[%s384 + $0x20] sm:$0xf]
    %v394 = vld [vmem:[%s384 + $0x24] sm:$0xf]
    %v395 = vld [vmem:[%s384 + $0x28] sm:$0xf]
    %v396 = vld [vmem:[%s384 + $0x2c] sm:$0xf]
    %v397 = vld [vmem:[%s384 + $0x30] sm:$0xf]
    %v398 = vld [vmem:[%s384 + $0x34] sm:$0xf]
    %v399 = vld [vmem:[%s384 + $0x38] sm:$0xf]
    %v400 = vld [vmem:[%s384 + $0x3c] sm:$0xf]
    %s401 = scalar_lea.vmem [#allocation7], 3
    %v402 = vld [vmem:[%s401] sm:$0x1]
    %v404 = vlaneseq
    %v405 = vshrl.u32 %v404, 7
    %v406 = vsub.s32 0, %v405
    %v407 = vrot.slane %v402, %v406
    %v425 = vunpack.c.l.b16 %v385
    %v426 = vunpack.c.l.b16 %v386
    %v427 = vunpack.c.l.b16 %v387
    %v428 = vunpack.c.l.b16 %v388
    %v429 = vunpack.c.l.b16 %v389
    %v430 = vunpack.c.l.b16 %v390
    %v431 = vunpack.c.l.b16 %v391
    %v432 = vunpack.c.l.b16 %v392
    %v433 = vunpack.c.l.b16 %v393
    %v434 = vunpack.c.l.b16 %v394
    %v435 = vunpack.c.l.b16 %v395
    %v436 = vunpack.c.l.b16 %v396
    %v437 = vunpack.c.l.b16 %v397
    %v438 = vunpack.c.l.b16 %v398
    %v439 = vunpack.c.l.b16 %v399
    %v440 = vunpack.c.l.b16 %v400
    %v441 = vpack.c.b16 %v426, %v425
    %v442 = vpack.c.b16 %v428, %v427
    %v443 = vpack.c.b16 %v430, %v429
    %v444 = vpack.c.b16 %v432, %v431
    %v445 = vpack.c.b16 %v434, %v433
    %v446 = vpack.c.b16 %v436, %v435
    %v447 = vpack.c.b16 %v438, %v437
    %v448 = vpack.c.b16 %v440, %v439
    %457 = vmatprep.subr.bf16.mxu0 0
    %458 = vmatpush1.bf16.msra.mxu0 %v441
    %459 = vmatprep.subr.bf16.mxu0 0
    %460 = vmatpush1.bf16.msra.mxu0 %v442
    %461 = vmatprep.subr.bf16.mxu0 0
    %462 = vmatpush1.bf16.msra.mxu0 %v443
    %463 = vmatprep.subr.bf16.mxu0 0
    %464 = vmatpush1.bf16.msra.mxu0 %v444
    %465 = vmatprep.subr.bf16.mxu0 0
    %466 = vmatpush1.bf16.msra.mxu0 %v445
    %467 = vmatprep.subr.bf16.mxu0 0
    %468 = vmatpush1.bf16.msra.mxu0 %v446
    %469 = vmatprep.subr.bf16.mxu0 0
    %470 = vmatpush1.bf16.msra.mxu0 %v447
    %471 = vmatprep.subr.bf16.mxu0 0
    %472 = vmatpush1.bf16.msra.mxu0 %v448
    %473 = vmatprep.subr.bf16.mxu0 0
    %474 = vmatpush1.bf16.msra.mxu0 0
    %475 = vmatprep.subr.bf16.mxu0 0
    %476 = vmatpush1.bf16.msra.mxu0 0
    %477 = vmatprep.subr.bf16.mxu0 0
    %478 = vmatpush1.bf16.msra.mxu0 0
    %479 = vmatprep.subr.bf16.mxu0 0
    %480 = vmatpush1.bf16.msra.mxu0 0
    %481 = vmatprep.subr.bf16.mxu0 0
    %482 = vmatpush1.bf16.msra.mxu0 0
    %483 = vmatprep.subr.bf16.mxu0 0
    %484 = vmatpush1.bf16.msra.mxu0 0
    %485 = vmatprep.subr.bf16.mxu0 0
    %486 = vmatpush1.bf16.msra.mxu0 0
    %487 = vmatprep.subr.bf16.mxu0 0
    %488 = vmatpush1.bf16.msra.mxu0 0
    %489 = vmatprep.mubr.bf16.mxu0 0
    %490 = vmatmul.mubr.bf16.gmra.mrb[0].mxu0 %v383
    %v491 = vpop.f32.mrb[0].mxu0
    %v492 = vadd.f32 %v407, %v491
    %v493 = vpop.f32.mrb[0].mxu0
    %v494 = vpop.f32.mrb[0].mxu0
    %v495 = vpop.f32.mrb[0].mxu0
    %496 = vdwg.mxu0
    %v497 = vmul.f32 %v492, 0.5
    %v498 = vmul.f32 %v492, 0.70710677
    %v499 = verf.f32.pop %v498
    %v500 = vadd.f32 %v499, 1.0
    %v501 = vmul.f32 %v497, %v500
    %v502 = vpack.c.bf16 %v501, %v501
    %s503 = scalar_lea.vmem [#allocation5], 256
    %v504 = vld [vmem:[%s503] sm:$0xf]
    %v505 = vld [vmem:[%s503 + $0x4] sm:$0xf]
    %v506 = vld [vmem:[%s503 + $0x8] sm:$0xf]
    %v507 = vld [vmem:[%s503 + $0xc] sm:$0xf]
    %v508 = vld [vmem:[%s503 + $0x10] sm:$0xf]
    %v509 = vld [vmem:[%s503 + $0x14] sm:$0xf]
    %v510 = vld [vmem:[%s503 + $0x18] sm:$0xf]
    %v511 = vld [vmem:[%s503 + $0x1c] sm:$0xf]
    %v512 = vld [vmem:[%s503 + $0x20] sm:$0xf]
    %v513 = vld [vmem:[%s503 + $0x24] sm:$0xf]
    %v514 = vld [vmem:[%s503 + $0x28] sm:$0xf]
    %v515 = vld [vmem:[%s503 + $0x2c] sm:$0xf]
    %v516 = vld [vmem:[%s503 + $0x30] sm:$0xf]
    %v517 = vld [vmem:[%s503 + $0x34] sm:$0xf]
    %v518 = vld [vmem:[%s503 + $0x38] sm:$0xf]
    %v519 = vld [vmem:[%s503 + $0x3c] sm:$0xf]
    %s520 = scalar_lea.vmem [#allocation7], 4
    %v521 = vld [vmem:[%s520] sm:$0x1]
    %v523 = vlaneseq
    %v524 = vshrl.u32 %v523, 7
    %v525 = vsub.s32 0, %v524
    %v526 = vrot.slane %v521, %v525
    %v544 = vunpack.c.l.b16 %v504
    %v545 = vunpack.c.l.b16 %v505
    %v546 = vunpack.c.l.b16 %v506
    %v547 = vunpack.c.l.b16 %v507
    %v548 = vunpack.c.l.b16 %v508
    %v549 = vunpack.c.l.b16 %v509
    %v550 = vunpack.c.l.b16 %v510
    %v551 = vunpack.c.l.b16 %v511
    %v552 = vunpack.c.l.b16 %v512
    %v553 = vunpack.c.l.b16 %v513
    %v554 = vunpack.c.l.b16 %v514
    %v555 = vunpack.c.l.b16 %v515
    %v556 = vunpack.c.l.b16 %v516
    %v557 = vunpack.c.l.b16 %v517
    %v558 = vunpack.c.l.b16 %v518
    %v559 = vunpack.c.l.b16 %v519
    %v560 = vpack.c.b16 %v545, %v544
    %v561 = vpack.c.b16 %v547, %v546
    %v562 = vpack.c.b16 %v549, %v548
    %v563 = vpack.c.b16 %v551, %v550
    %v564 = vpack.c.b16 %v553, %v552
    %v565 = vpack.c.b16 %v555, %v554
    %v566 = vpack.c.b16 %v557, %v556
    %v567 = vpack.c.b16 %v559, %v558
    %576 = vmatprep.subr.bf16.mxu0 0
    %577 = vmatpush1.bf16.msra.mxu0 %v560
    %578 = vmatprep.subr.bf16.mxu0 0
    %579 = vmatpush1.bf16.msra.mxu0 %v561
    %580 = vmatprep.subr.bf16.mxu0 0
    %581 = vmatpush1.bf16.msra.mxu0 %v562
    %582 = vmatprep.subr.bf16.mxu0 0
    %583 = vmatpush1.bf16.msra.mxu0 %v563
    %584 = vmatprep.subr.bf16.mxu0 0
    %585 = vmatpush1.bf16.msra.mxu0 %v564
    %586 = vmatprep.subr.bf16.mxu0 0
    %587 = vmatpush1.bf16.msra.mxu0 %v565
    %588 = vmatprep.subr.bf16.mxu0 0
    %589 = vmatpush1.bf16.msra.mxu0 %v566
    %590 = vmatprep.subr.bf16.mxu0 0
    %591 = vmatpush1.bf16.msra.mxu0 %v567
    %592 = vmatprep.subr.bf16.mxu0 0
    %593 = vmatpush1.bf16.msra.mxu0 0
    %594 = vmatprep.subr.bf16.mxu0 0
    %595 = vmatpush1.bf16.msra.mxu0 0
    %596 = vmatprep.subr.bf16.mxu0 0
    %597 = vmatpush1.bf16.msra.mxu0 0
    %598 = vmatprep.subr.bf16.mxu0 0
    %599 = vmatpush1.bf16.msra.mxu0 0
    %600 = vmatprep.subr.bf16.mxu0 0
    %601 = vmatpush1.bf16.msra.mxu0 0
    %602 = vmatprep.subr.bf16.mxu0 0
    %603 = vmatpush1.bf16.msra.mxu0 0
    %604 = vmatprep.subr.bf16.mxu0 0
    %605 = vmatpush1.bf16.msra.mxu0 0
    %606 = vmatprep.subr.bf16.mxu0 0
    %607 = vmatpush1.bf16.msra.mxu0 0
    %608 = vmatprep.mubr.bf16.mxu0 0
    %609 = vmatmul.mubr.bf16.gmra.mrb[0].mxu0 %v502
    %v610 = vpop.f32.mrb[0].mxu0
    %v611 = vadd.f32 %v526, %v610
    %v612 = vpop.f32.mrb[0].mxu0
    %v613 = vpop.f32.mrb[0].mxu0
    %v614 = vpop.f32.mrb[0].mxu0
    %615 = vdwg.mxu0
    %v616 = vmul.f32 %v611, 0.5
    %v617 = vmul.f32 %v611, 0.70710677
    %v618 = verf.f32.pop %v617
    %v619 = vadd.f32 %v618, 1.0
    %v620 = vmul.f32 %v616, %v619
    %v621 = vpack.c.bf16 %v620, %v620
    %s622 = scalar_lea.vmem [#allocation5], 320
    %v623 = vld [vmem:[%s622] sm:$0xf]
    %v624 = vld [vmem:[%s622 + $0x4] sm:$0xf]
    %v625 = vld [vmem:[%s622 + $0x8] sm:$0xf]
    %v626 = vld [vmem:[%s622 + $0xc] sm:$0xf]
    %v627 = vld [vmem:[%s622 + $0x10] sm:$0xf]
    %v628 = vld [vmem:[%s622 + $0x14] sm:$0xf]
    %v629 = vld [vmem:[%s622 + $0x18] sm:$0xf]
    %v630 = vld [vmem:[%s622 + $0x1c] sm:$0xf]
    %v631 = vld [vmem:[%s622 + $0x20] sm:$0xf]
    %v632 = vld [vmem:[%s622 + $0x24] sm:$0xf]
    %v633 = vld [vmem:[%s622 + $0x28] sm:$0xf]
    %v634 = vld [vmem:[%s622 + $0x2c] sm:$0xf]
    %v635 = vld [vmem:[%s622 + $0x30] sm:$0xf]
    %v636 = vld [vmem:[%s622 + $0x34] sm:$0xf]
    %v637 = vld [vmem:[%s622 + $0x38] sm:$0xf]
    %v638 = vld [vmem:[%s622 + $0x3c] sm:$0xf]
    %s639 = scalar_lea.vmem [#allocation7], 5
    %v640 = vld [vmem:[%s639] sm:$0x1]
    %v642 = vlaneseq
    %v643 = vshrl.u32 %v642, 7
    %v644 = vsub.s32 0, %v643
    %v645 = vrot.slane %v640, %v644
    %v663 = vunpack.c.l.b16 %v623
    %v664 = vunpack.c.l.b16 %v624
    %v665 = vunpack.c.l.b16 %v625
    %v666 = vunpack.c.l.b16 %v626
    %v667 = vunpack.c.l.b16 %v627
    %v668 = vunpack.c.l.b16 %v628
    %v669 = vunpack.c.l.b16 %v629
    %v670 = vunpack.c.l.b16 %v630
    %v671 = vunpack.c.l.b16 %v631
    %v672 = vunpack.c.l.b16 %v632
    %v673 = vunpack.c.l.b16 %v633
    %v674 = vunpack.c.l.b16 %v634
    %v675 = vunpack.c.l.b16 %v635
    %v676 = vunpack.c.l.b16 %v636
    %v677 = vunpack.c.l.b16 %v637
    %v678 = vunpack.c.l.b16 %v638
    %v679 = vpack.c.b16 %v664, %v663
    %v680 = vpack.c.b16 %v666, %v665
    %v681 = vpack.c.b16 %v668, %v667
    %v682 = vpack.c.b16 %v670, %v669
    %v683 = vpack.c.b16 %v672, %v671
    %v684 = vpack.c.b16 %v674, %v673
    %v685 = vpack.c.b16 %v676, %v675
    %v686 = vpack.c.b16 %v678, %v677
    %695 = vmatprep.subr.bf16.mxu0 0
    %696 = vmatpush1.bf16.msra.mxu0 %v679
    %697 = vmatprep.subr.bf16.mxu0 0
    %698 = vmatpush1.bf16.msra.mxu0 %v680
    %699 = vmatprep.subr.bf16.mxu0 0
    %700 = vmatpush1.bf16.msra.mxu0 %v681
    %701 = vmatprep.subr.bf16.mxu0 0
    %702 = vmatpush1.bf16.msra.mxu0 %v682
    %703 = vmatprep.subr.bf16.mxu0 0
    %704 = vmatpush1.bf16.msra.mxu0 %v683
    %705 = vmatprep.subr.bf16.mxu0 0
    %706 = vmatpush1.bf16.msra.mxu0 %v684
    %707 = vmatprep.subr.bf16.mxu0 0
    %708 = vmatpush1.bf16.msra.mxu0 %v685
    %709 = vmatprep.subr.bf16.mxu0 0
    %710 = vmatpush1.bf16.msra.mxu0 %v686
    %711 = vmatprep.subr.bf16.mxu0 0
    %712 = vmatpush1.bf16.msra.mxu0 0
    %713 = vmatprep.subr.bf16.mxu0 0
    %714 = vmatpush1.bf16.msra.mxu0 0
    %715 = vmatprep.subr.bf16.mxu0 0
    %716 = vmatpush1.bf16.msra.mxu0 0
    %717 = vmatprep.subr.bf16.mxu0 0
    %718 = vmatpush1.bf16.msra.mxu0 0
    %719 = vmatprep.subr.bf16.mxu0 0
    %720 = vmatpush1.bf16.msra.mxu0 0
    %721 = vmatprep.subr.bf16.mxu0 0
    %722 = vmatpush1.bf16.msra.mxu0 0
    %723 = vmatprep.subr.bf16.mxu0 0
    %724 = vmatpush1.bf16.msra.mxu0 0
    %725 = vmatprep.subr.bf16.mxu0 0
    %726 = vmatpush1.bf16.msra.mxu0 0
    %727 = vmatprep.mubr.bf16.mxu0 0
    %728 = vmatmul.mubr.bf16.gmra.mrb[0].mxu0 %v621
    %v729 = vpop.f32.mrb[0].mxu0
    %v730 = vadd.f32 %v645, %v729
    %v731 = vpop.f32.mrb[0].mxu0
    %v732 = vpop.f32.mrb[0].mxu0
    %v733 = vpop.f32.mrb[0].mxu0
    %734 = vdwg.mxu0
    %v735 = vmul.f32 %v730, 0.5
    %v736 = vmul.f32 %v730, 0.70710677
    %v737 = verf.f32.pop %v736
    %v738 = vadd.f32 %v737, 1.0
    %v739 = vmul.f32 %v735, %v738
    %v740 = vpack.c.bf16 %v739, %v739
    %s741 = scalar_lea.vmem [#allocation5], 384
    %v742 = vld [vmem:[%s741] sm:$0xf]
    %v743 = vld [vmem:[%s741 + $0x4] sm:$0xf]
    %v744 = vld [vmem:[%s741 + $0x8] sm:$0xf]
    %v745 = vld [vmem:[%s741 + $0xc] sm:$0xf]
    %v746 = vld [vmem:[%s741 + $0x10] sm:$0xf]
    %v747 = vld [vmem:[%s741 + $0x14] sm:$0xf]
    %v748 = vld [vmem:[%s741 + $0x18] sm:$0xf]
    %v749 = vld [vmem:[%s741 + $0x1c] sm:$0xf]
    %v750 = vld [vmem:[%s741 + $0x20] sm:$0xf]
    %v751 = vld [vmem:[%s741 + $0x24] sm:$0xf]
    %v752 = vld [vmem:[%s741 + $0x28] sm:$0xf]
    %v753 = vld [vmem:[%s741 + $0x2c] sm:$0xf]
    %v754 = vld [vmem:[%s741 + $0x30] sm:$0xf]
    %v755 = vld [vmem:[%s741 + $0x34] sm:$0xf]
    %v756 = vld [vmem:[%s741 + $0x38] sm:$0xf]
    %v757 = vld [vmem:[%s741 + $0x3c] sm:$0xf]
    %s758 = scalar_lea.vmem [#allocation7], 6
    %v759 = vld [vmem:[%s758] sm:$0x1]
    %v761 = vlaneseq
    %v762 = vshrl.u32 %v761, 7
    %v763 = vsub.s32 0, %v762
    %v764 = vrot.slane %v759, %v763
    %v782 = vunpack.c.l.b16 %v742
    %v783 = vunpack.c.l.b16 %v743
    %v784 = vunpack.c.l.b16 %v744
    %v785 = vunpack.c.l.b16 %v745
    %v786 = vunpack.c.l.b16 %v746
    %v787 = vunpack.c.l.b16 %v747
    %v788 = vunpack.c.l.b16 %v748
    %v789 = vunpack.c.l.b16 %v749
    %v790 = vunpack.c.l.b16 %v750
    %v791 = vunpack.c.l.b16 %v751
    %v792 = vunpack.c.l.b16 %v752
    %v793 = vunpack.c.l.b16 %v753
    %v794 = vunpack.c.l.b16 %v754
    %v795 = vunpack.c.l.b16 %v755
    %v796 = vunpack.c.l.b16 %v756
    %v797 = vunpack.c.l.b16 %v757
    %v798 = vpack.c.b16 %v783, %v782
    %v799 = vpack.c.b16 %v785, %v784
    %v800 = vpack.c.b16 %v787, %v786
    %v801 = vpack.c.b16 %v789, %v788
    %v802 = vpack.c.b16 %v791, %v790
    %v803 = vpack.c.b16 %v793, %v792
    %v804 = vpack.c.b16 %v795, %v794
    %v805 = vpack.c.b16 %v797, %v796
    %814 = vmatprep.subr.bf16.mxu0 0
    %815 = vmatpush1.bf16.msra.mxu0 %v798
    %816 = vmatprep.subr.bf16.mxu0 0
    %817 = vmatpush1.bf16.msra.mxu0 %v799
    %818 = vmatprep.subr.bf16.mxu0 0
    %819 = vmatpush1.bf16.msra.mxu0 %v800
    %820 = vmatprep.subr.bf16.mxu0 0
    %821 = vmatpush1.bf16.msra.mxu0 %v801
    %822 = vmatprep.subr.bf16.mxu0 0
    %823 = vmatpush1.bf16.msra.mxu0 %v802
    %824 = vmatprep.subr.bf16.mxu0 0
    %825 = vmatpush1.bf16.msra.mxu0 %v803
    %826 = vmatprep.subr.bf16.mxu0 0
    %827 = vmatpush1.bf16.msra.mxu0 %v804
    %828 = vmatprep.subr.bf16.mxu0 0
    %829 = vmatpush1.bf16.msra.mxu0 %v805
    %830 = vmatprep.subr.bf16.mxu0 0
    %831 = vmatpush1.bf16.msra.mxu0 0
    %832 = vmatprep.subr.bf16.mxu0 0
    %833 = vmatpush1.bf16.msra.mxu0 0
    %834 = vmatprep.subr.bf16.mxu0 0
    %835 = vmatpush1.bf16.msra.mxu0 0
    %836 = vmatprep.subr.bf16.mxu0 0
    %837 = vmatpush1.bf16.msra.mxu0 0
    %838 = vmatprep.subr.bf16.mxu0 0
    %839 = vmatpush1.bf16.msra.mxu0 0
    %840 = vmatprep.subr.bf16.mxu0 0
    %841 = vmatpush1.bf16.msra.mxu0 0
    %842 = vmatprep.subr.bf16.mxu0 0
    %843 = vmatpush1.bf16.msra.mxu0 0
    %844 = vmatprep.subr.bf16.mxu0 0
    %845 = vmatpush1.bf16.msra.mxu0 0
    %846 = vmatprep.mubr.bf16.mxu0 0
    %847 = vmatmul.mubr.bf16.gmra.mrb[0].mxu0 %v740
    %v848 = vpop.f32.mrb[0].mxu0
    %v849 = vadd.f32 %v764, %v848
    %v850 = vpop.f32.mrb[0].mxu0
    %v851 = vpop.f32.mrb[0].mxu0
    %v852 = vpop.f32.mrb[0].mxu0
    %853 = vdwg.mxu0
    %v854 = vmul.f32 %v849, 0.5
    %v855 = vmul.f32 %v849, 0.70710677
    %v856 = verf.f32.pop %v855
    %v857 = vadd.f32 %v856, 1.0
    %v858 = vmul.f32 %v854, %v857
    %v859 = vpack.c.bf16 %v858, %v858
    %s860 = scalar_lea.vmem [#allocation5], 448
    %v861 = vld [vmem:[%s860] sm:$0xf]
    %v862 = vld [vmem:[%s860 + $0x4] sm:$0xf]
    %v863 = vld [vmem:[%s860 + $0x8] sm:$0xf]
    %v864 = vld [vmem:[%s860 + $0xc] sm:$0xf]
    %v865 = vld [vmem:[%s860 + $0x10] sm:$0xf]
    %v866 = vld [vmem:[%s860 + $0x14] sm:$0xf]
    %v867 = vld [vmem:[%s860 + $0x18] sm:$0xf]
    %v868 = vld [vmem:[%s860 + $0x1c] sm:$0xf]
    %v869 = vld [vmem:[%s860 + $0x20] sm:$0xf]
    %v870 = vld [vmem:[%s860 + $0x24] sm:$0xf]
    %v871 = vld [vmem:[%s860 + $0x28] sm:$0xf]
    %v872 = vld [vmem:[%s860 + $0x2c] sm:$0xf]
    %v873 = vld [vmem:[%s860 + $0x30] sm:$0xf]
    %v874 = vld [vmem:[%s860 + $0x34] sm:$0xf]
    %v875 = vld [vmem:[%s860 + $0x38] sm:$0xf]
    %v876 = vld [vmem:[%s860 + $0x3c] sm:$0xf]
    %s877 = scalar_lea.vmem [#allocation7], 7
    %v878 = vld [vmem:[%s877] sm:$0x1]
    %v880 = vlaneseq
    %v881 = vshrl.u32 %v880, 7
    %v882 = vsub.s32 0, %v881
    %v883 = vrot.slane %v878, %v882
    %v901 = vunpack.c.l.b16 %v861
    %v902 = vunpack.c.l.b16 %v862
    %v903 = vunpack.c.l.b16 %v863
    %v904 = vunpack.c.l.b16 %v864
    %v905 = vunpack.c.l.b16 %v865
    %v906 = vunpack.c.l.b16 %v866
    %v907 = vunpack.c.l.b16 %v867
    %v908 = vunpack.c.l.b16 %v868
    %v909 = vunpack.c.l.b16 %v869
    %v910 = vunpack.c.l.b16 %v870
    %v911 = vunpack.c.l.b16 %v871
    %v912 = vunpack.c.l.b16 %v872
    %v913 = vunpack.c.l.b16 %v873
    %v914 = vunpack.c.l.b16 %v874
    %v915 = vunpack.c.l.b16 %v875
    %v916 = vunpack.c.l.b16 %v876
    %v917 = vpack.c.b16 %v902, %v901
    %v918 = vpack.c.b16 %v904, %v903
    %v919 = vpack.c.b16 %v906, %v905
    %v920 = vpack.c.b16 %v908, %v907
    %v921 = vpack.c.b16 %v910, %v909
    %v922 = vpack.c.b16 %v912, %v911
    %v923 = vpack.c.b16 %v914, %v913
    %v924 = vpack.c.b16 %v916, %v915
    %933 = vmatprep.subr.bf16.mxu0 0
    %934 = vmatpush1.bf16.msra.mxu0 %v917
    %935 = vmatprep.subr.bf16.mxu0 0
    %936 = vmatpush1.bf16.msra.mxu0 %v918
    %937 = vmatprep.subr.bf16.mxu0 0
    %938 = vmatpush1.bf16.msra.mxu0 %v919
    %939 = vmatprep.subr.bf16.mxu0 0
    %940 = vmatpush1.bf16.msra.mxu0 %v920
    %941 = vmatprep.subr.bf16.mxu0 0
    %942 = vmatpush1.bf16.msra.mxu0 %v921
    %943 = vmatprep.subr.bf16.mxu0 0
    %944 = vmatpush1.bf16.msra.mxu0 %v922
    %945 = vmatprep.subr.bf16.mxu0 0
    %946 = vmatpush1.bf16.msra.mxu0 %v923
    %947 = vmatprep.subr.bf16.mxu0 0
    %948 = vmatpush1.bf16.msra.mxu0 %v924
    %949 = vmatprep.subr.bf16.mxu0 0
    %950 = vmatpush1.bf16.msra.mxu0 0
    %951 = vmatprep.subr.bf16.mxu0 0
    %952 = vmatpush1.bf16.msra.mxu0 0
    %953 = vmatprep.subr.bf16.mxu0 0
    %954 = vmatpush1.bf16.msra.mxu0 0
    %955 = vmatprep.subr.bf16.mxu0 0
    %956 = vmatpush1.bf16.msra.mxu0 0
    %957 = vmatprep.subr.bf16.mxu0 0
    %958 = vmatpush1.bf16.msra.mxu0 0
    %959 = vmatprep.subr.bf16.mxu0 0
    %960 = vmatpush1.bf16.msra.mxu0 0
    %961 = vmatprep.subr.bf16.mxu0 0
    %962 = vmatpush1.bf16.msra.mxu0 0
    %963 = vmatprep.subr.bf16.mxu0 0
    %964 = vmatpush1.bf16.msra.mxu0 0
    %965 = vmatprep.mubr.bf16.mxu0 0
    %966 = vmatmul.mubr.bf16.gmra.mrb[0].mxu0 %v859
    %v967 = vpop.f32.mrb[0].mxu0
    %v968 = vadd.f32 %v883, %v967
    %v969 = vpop.f32.mrb[0].mxu0
    %v970 = vpop.f32.mrb[0].mxu0
    %v971 = vpop.f32.mrb[0].mxu0
    %972 = vdwg.mxu0
    %v973 = vmul.f32 %v968, 0.5
    %v974 = vmul.f32 %v968, 0.70710677
    %v975 = verf.f32.pop %v974
    %v976 = vadd.f32 %v975, 1.0
    %v977 = vmul.f32 %v973, %v976
    %978 = vst.msk [vmem:[#allocation8] sm:$0xff] %vm96, %v977
    // Predicated region
    $region26: #{tpu_custom_call.1} parent=1 // pred_check
      _
    $region27: #{tpu_custom_call.1} parent=1 // pred_check_branch
      %980 = sbr.rel (0) target = $region29
    $region28: #{tpu_custom_call.1} parent=1 // pred_region
      %s982 = ssub.s32 128, 128
      %983 = vsyncadd [#allocation4], %s982
      %s985 = sshll.u32 [#allocation8], 4
      %s986 = int_to_ptr.vmem [resolvable:$true] %s985
      %988 = dma.vmem_to_hbm [thread:$0]  %s986, 128, %s3, [#allocation4]
    $region29: #{tpu_custom_call.1} parent=1 // pred_fallthru
      _
    // Predicated region
    $region30: #{tpu_custom_call.1} parent=1 // pred_check
      _
    $region31: #{tpu_custom_call.1} parent=1 // pred_check_branch
      %990 = sbr.rel (0) target = $region33
    $region32: #{tpu_custom_call.1} parent=1 // pred_region
      %991 = dma.done [#allocation4], 128
    $region33: #{tpu_custom_call.1} parent=1 // pred_fallthru
      _
    %992 = vsyncpa [#allocation3], 1
    %993 = vsyncpa [#allocation6], 1
    %994 = vsyncpa [#allocation4], 1

</llo_original>
